<compile_context>
chip_gen: v6e
topology: v6e:2x2x1
jax: 0.10.0
libtpu: 0.0.40
codegen_flags: <defaults>
</compile_context>

<pallas_src>
import functools
import math

import jax
import jax.numpy as jnp
from jax.experimental import pallas as pl
from jax.experimental.pallas import tpu as pltpu

_LANE = 128


# --------------------------------------------------------------------------- #
# helpers
# --------------------------------------------------------------------------- #
def _sublane_multiple(dtype) -> int:
    """Native sublane tiling multiple: 8 (f32), 16 (bf16/f16), 32 (int8/fp8)."""
    return max(8, 32 // max(1, jnp.dtype(dtype).itemsize))


def _round_up(n: int, m: int) -> int:
    return -(-n // m) * m


@functools.lru_cache(maxsize=1)
def _generation_budgets():
    """(target_tile_bytes, vmem_limit_cap_bytes) tuned per TPU generation."""
    kind = ""
    try:
        kind = jax.devices()[0].device_kind.lower()
    except Exception:
        pass
    vmem_cap = None
    try:
        vmem_cap = int(pltpu.get_tpu_info().vmem_capacity_bytes)
    except Exception:
        pass
    if "v7" in kind or (vmem_cap is not None and vmem_cap <= (64 << 20)):
        # v7x: only 64 MiB VMEM per TC, ~1.6 TB/s/TC -> 8 MiB tiles, 56 MiB cap.
        return 8 << 20, 56 << 20
    if "v6" in kind:
        # v6e: 128 MiB VMEM, ~1.4 TB/s -> bigger tiles amortize per-step cost.
        return 12 << 20, 96 << 20
    # v5e / unknown: 4 MiB tiles are already ~10 us/step at 0.8 TB/s; the wins
    # come from sublane density, not bigger tiles.  Explicit limit beats the
    # 16 MiB default scoped VMEM.
    return 4 << 20, 48 << 20


def make_pe_table(d_model: int, max_len: int = 5000, dtype=jnp.float32):
    """Sinusoidal positional-encoding table, matching the PyTorch __init__.

    Built in f32 and cast ONCE here to the model dtype so the forward path
    never re-reads / re-writes the full table for an astype.
    NOTE: for bf16/f16 inputs PyTorch would promote x + f32 pe -> f32; we keep
    x's dtype instead (documented divergence).
    """
    position = jnp.arange(max_len, dtype=jnp.float32)[:, None]           # (max_len, 1)
    div_term = jnp.exp(
        jnp.arange(0, d_model, 2, dtype=jnp.float32) * (-math.log(10000.0) / d_model)
    )                                                                    # (ceil(d/2),)
    angles = position * div_term                                         # (max_len, ceil(d/2))
    pe = jnp.zeros((max_len, d_model), dtype=jnp.float32)
    pe = pe.at[:, 0::2].set(jnp.sin(angles))
    pe = pe.at[:, 1::2].set(jnp.cos(angles)[:, : d_model // 2])          # odd-d guard
    return pe.astype(dtype)                                              # (max_len, d_model)


# --------------------------------------------------------------------------- #
# kernel (shared by both layouts)
# --------------------------------------------------------------------------- #
def _add_pe_kernel(x_ref, pe_ref, o_ref):
    # flattened path: x (tile_b, tile_f) + pe (1, tile_f)      (row broadcast)
    # native 3-D path: x (tile_s, D)     + pe (tile_s, D)
    o_ref[...] = x_ref[...] + pe_ref[...]


# --------------------------------------------------------------------------- #
# native 3-D path: small batch, d_model a multiple of 128
# --------------------------------------------------------------------------- #
def _pe_native3d(x, pe, *, target_tile_bytes, vmem_cap, subl, itemsize):
    B, S, D = x.shape

    rows_budget = max(subl, (target_tile_bytes // (D * itemsize)) // subl * subl)
    tile_s = min((S // subl) * subl, rows_budget)          # multiple of subl
    # Keep >= 2 grid steps so v7x's second TensorCore isn't idle.
    if B == 1 and pl.cdiv(S, tile_s) == 1 and S >= 2 * subl:
        tile_s = _round_up(-(-S // 2), subl)
    grid = (pl.cdiv(S, tile_s), B)                         # seq OUTER, batch INNER

    def _vmem_need(ts):
        t = _round_up(ts, subl) * D * itemsize             # lane- & sublane-dense
        return 2 * (2 * t) + 2 * t + (2 << 20)             # x-in + out (dbl-buf) + pe + margin

    while _vmem_need(tile_s) > vmem_cap and tile_s > subl:
        tile_s = max(subl, (tile_s // 2) // subl * subl)
        grid = (pl.cdiv(S, tile_s), B)
    vmem_limit = int(min(max(_vmem_need(tile_s), 8 << 20), vmem_cap))

    return pl.pallas_call(
        _add_pe_kernel,
        out_shape=jax.ShapeDtypeStruct((B, S, D), x.dtype),
        grid=grid,
        in_specs=[
            pl.BlockSpec((None, tile_s, D), lambda sj, bi: (bi, sj, 0)),  # x, batch squeezed
            pl.BlockSpec((tile_s, D), lambda sj, bi: (sj, 0)),            # pe window (reused over batch)
        ],
        out_specs=pl.BlockSpec((None, tile_s, D), lambda sj, bi: (bi, sj, 0)),
        input_output_aliases={0: 0},                                      # donate x
        compiler_params=pltpu.CompilerParams(
            dimension_semantics=("parallel", "parallel"),
            vmem_limit_bytes=vmem_limit,
        ),
    )(x, pe)


# --------------------------------------------------------------------------- #
# flattened (B, S*D) path: lane-dense even when d_model < 128
# --------------------------------------------------------------------------- #
def _pe_flat(x, pe, *, target_tile_bytes, vmem_cap, subl, itemsize):
    B, S, D = x.shape
    max_len = pe.shape[0]
    F = S * D
    x2 = x.reshape(B, F)                                   # contiguous reshape: no HBM copy

    if F <= _LANE:
        tile_f, tile_b = F, B                              # single full-extent block
    else:
        F_aligned = F if F % _LANE == 0 else (F // _LANE) * _LANE
        # Cap lane width (<= 32768 lanes); assume at least `subl` padded rows.
        max_lanes = (target_tile_bytes // (subl * itemsize)) // _LANE * _LANE
        max_lanes = max(_LANE, min(max_lanes, 32 * 1024))
        tile_f = int(min(F_aligned, max_lanes))
        if B < subl:
            tile_b = B                                     # full batch dim (padded, accounted below)
        else:
            rows_budget = target_tile_bytes // (tile_f * itemsize)
            tile_b = int(min(B, max(subl, (rows_budget // subl) * subl)))
        # Keep >= 2 grid steps so v7x's second TensorCore isn't idle.
        if pl.cdiv(F, tile_f) * pl.cdiv(B, tile_b) == 1 and F >= 2 * _LANE:
            tile_f = _round_up(-(-F // 2), _LANE)

    grid = (pl.cdiv(F, tile_f), pl.cdiv(B, tile_b))        # F OUTER, batch INNER (pe reuse)

    def _vmem_need(tb, tf):
        x_tile = _round_up(tb, subl) * tf * itemsize       # sublane-padded footprint
        pe_tile = subl * tf * itemsize                     # (1, tile_f) pads to subl sublanes
        return 2 * (2 * x_tile) + 2 * pe_tile + (2 << 20)

    while _vmem_need(tile_b, tile_f) > vmem_cap and (tile_b > subl or tile_f > _LANE):
        if tile_b > subl:
            tile_b = max(subl, (tile_b // 2) // subl * subl)
        else:
            tile_f = max(_LANE, (tile_f // 2) // _LANE * _LANE)
        grid = (pl.cdiv(F, tile_f), pl.cdiv(B, tile_b))
    vmem_limit = int(min(max(_vmem_need(tile_b, tile_f), 8 << 20), vmem_cap))

    # pe, flattened.  Main path: whole table, windowed by the BlockSpec
    # (flattened column c needs pe[c // D, c % D] == pe_flat[c]) -> no per-call
    # pe[:S] slice in HBM.  Tiny-F fallback: slice once so the block equals the
    # full last dim.
    if tile_f % _LANE == 0:
        pe2 = pe.reshape(1, max_len * D)
    else:
        pe2 = pe[:S].reshape(1, F)

    out2 = pl.pallas_call(
        _add_pe_kernel,
        out_shape=jax.ShapeDtypeStruct((B, F), x.dtype),
        grid=grid,
        in_specs=[
            pl.BlockSpec((tile_b, tile_f), lambda fj, bi: (bi, fj)),     # x slab
            pl.BlockSpec((1, tile_f), lambda fj, bi: (0, fj)),           # pe window
        ],
        out_specs=pl.BlockSpec((tile_b, tile_f), lambda fj, bi: (bi, fj)),
        input_output_aliases={0: 0},                                     # donate x
        compiler_params=pltpu.CompilerParams(
            dimension_semantics=("parallel", "parallel"),
            vmem_limit_bytes=vmem_limit,
        ),
    )(x2, pe2)
    return out2.reshape(B, S, D)


# --------------------------------------------------------------------------- #
# public entry point
# --------------------------------------------------------------------------- #
def positional_encoding(x: jax.Array, pe_table: jax.Array,
                        *, target_tile_bytes: int | None = None,
                        vmem_cap_bytes: int | None = None) -> jax.Array:
    """x: (B, S, D). Returns x + pe_table[:S] broadcast over batch (x's dtype)."""
    B, S, D = x.shape
    max_len, d_model = pe_table.shape
    assert d_model == D and S <= max_len

    if pe_table.dtype != x.dtype:
        # Guard only; prefer make_pe_table(..., dtype=x.dtype) so this is a no-op.
        # NOTE: PyTorch promotes (bf16 x + f32 pe -> f32); we keep x's dtype.
        pe_table = pe_table.astype(x.dtype)

    gen_tile, gen_cap = _generation_budgets()
    target_tile_bytes = gen_tile if target_tile_bytes is None else target_tile_bytes
    vmem_cap_bytes = gen_cap if vmem_cap_bytes is None else vmem_cap_bytes

    itemsize = jnp.dtype(x.dtype).itemsize
    subl = _sublane_multiple(x.dtype)

    if D % _LANE == 0 and B < subl and S >= subl:
        # Small batch with lane-dense d_model: native 3-D blocking avoids 4-8x
        # sublane padding of (B, tile_f) tiles and keeps stores unmasked.
        return _pe_native3d(x, pe_table, target_tile_bytes=target_tile_bytes,
                            vmem_cap=vmem_cap_bytes, subl=subl, itemsize=itemsize)
    return _pe_flat(x, pe_table, target_tile_bytes=target_tile_bytes,
                    vmem_cap=vmem_cap_bytes, subl=subl, itemsize=itemsize)


# --------------------------------------------------------------------------- #
# self-test
# --------------------------------------------------------------------------- #
if __name__ == "__main__":
    key = jax.random.PRNGKey(0)
    k1, k2, k3, k4, k5 = jax.random.split(key, 5)

    # Case 1: module-demo shapes (d_model=32 < 128 lanes) -> flattened path.
    B, S, D, ML = 2, 8, 32, 64
    x = jax.random.normal(k1, (B, S, D), dtype=jnp.float32)
    pe = make_pe_table(D, max_len=ML)
    ref = x + pe[:S][None, :, :]
    out = jax.block_until_ready(positional_encoding(x, pe))
    assert out.shape == ref.shape and out.dtype == ref.dtype
    assert jnp.allclose(out, ref, atol=1e-6, rtol=1e-6)

    # Case 2: flattened path with a partial (masked) last F-tile.
    B2, S2, D2, ML2 = 3, 20, 48, 64
    x2 = jax.random.normal(k2, (B2, S2, D2), dtype=jnp.float32)
    pe2 = make_pe_table(D2, max_len=ML2)
    ref2 = x2 + pe2[:S2][None, :, :]
    out2 = jax.block_until_ready(positional_encoding(x2, pe2))
    assert jnp.allclose(out2, ref2, atol=1e-6, rtol=1e-6)

    # Case 3: native 3-D path (small B, D % 128 == 0), multi-tile seq with a
    # partial last seq tile (small target_tile_bytes forces tiling).
    B3, S3, D3, ML3 = 2, 40, 128, 64
    x3 = jax.random.normal(k3, (B3, S3, D3), dtype=jnp.float32)
    pe3 = make_pe_table(D3, max_len=ML3)
    ref3 = x3 + pe3[:S3][None, :, :]
    out3 = jax.block_until_ready(positional_encoding(x3, pe3, target_tile_bytes=8 * 1024))
    assert jnp.allclose(out3, ref3, atol=1e-6, rtol=1e-6)

    # Case 4: flattened path, B >= 8, partial last batch tile + multi F-tiles.
    B4, S4, D4, ML4 = 9, 16, 32, 32
    x4 = jax.random.normal(k4, (B4, S4, D4), dtype=jnp.float32)
    pe4 = make_pe_table(D4, max_len=ML4)
    ref4 = x4 + pe4[:S4][None, :, :]
    out4 = jax.block_until_ready(positional_encoding(x4, pe4, target_tile_bytes=4 * 1024))
    assert jnp.allclose(out4, ref4, atol=1e-6, rtol=1e-6)

    # Case 5: bf16 (dtype-aware sublane multiple; pe pre-cast at construction).
    B5, S5, D5, ML5 = 2, 16, 32, 32
    x5 = jax.random.normal(k5, (B5, S5, D5), dtype=jnp.bfloat16)
    pe5 = make_pe_table(D5, max_len=ML5, dtype=jnp.bfloat16)
    ref5 = x5 + pe5[:S5][None, :, :]
    out5 = jax.block_until_ready(positional_encoding(x5, pe5))
    assert out5.dtype == jnp.bfloat16
    assert jnp.allclose(out5.astype(jnp.float32), ref5.astype(jnp.float32),
                        atol=1e-2, rtol=1e-2)

    print("KERNEL_OK")
</pallas_src>

<mosaic_0001>
module attributes {stable_mosaic.version = 11 : i64} {
  func.func @_add_pe_kernel(%arg0: i32, %arg1: i32, %arg2: memref<2x128xf32, #tpu.memory_space<vmem>>, %arg3: memref<1x128xf32, #tpu.memory_space<vmem>>, %arg4: memref<2x128xf32, #tpu.memory_space<vmem>>) attributes {dimension_semantics = [#tpu.dimension_semantics<parallel>, #tpu.dimension_semantics<parallel>], iteration_bounds = array<i64: 2, 1>, scalar_prefetch = 0 : i64, scratch_operands = 0 : i64, tpu.core_type = #tpu.core_type<tc>, window_params = [{transform_indices = @transform_0, window_bounds = array<i64: 2, 128>}, {transform_indices = @transform_1, window_bounds = array<i64: 1, 128>}, {transform_indices = @transform_2, window_bounds = array<i64: 2, 128>}]} {
    %c0 = arith.constant 0 : index
    %c0_0 = arith.constant 0 : index
    %0 = vector.load %arg2[%c0, %c0_0] : memref<2x128xf32, #tpu.memory_space<vmem>>, vector<2x128xf32>
    %c0_1 = arith.constant 0 : index
    %c0_2 = arith.constant 0 : index
    %1 = vector.load %arg3[%c0_1, %c0_2] : memref<1x128xf32, #tpu.memory_space<vmem>>, vector<1x128xf32>
    %2 = vector.broadcast %1 : vector<1x128xf32> to vector<2x128xf32>
    %3 = arith.addf %0, %2 : vector<2x128xf32>
    %c0_3 = arith.constant 0 : index
    %c0_4 = arith.constant 0 : index
    %4 = vector.load %arg4[%c0_3, %c0_4] : memref<2x128xf32, #tpu.memory_space<vmem>>, vector<2x128xf32>
    tpu.vector_store %arg4[%c0_3, %c0_4], %3 {strides = array<i32>} : memref<2x128xf32, #tpu.memory_space<vmem>>, vector<2x128xf32>,
    return
  }
  func.func @transform_0(%arg0: i32, %arg1: i32) -> (i32, i32) {
    %c0_i32 = arith.constant 0 : i32
    return %arg1, %arg0 : i32, i32
  }
  func.func @transform_1(%arg0: i32, %arg1: i32) -> (i32, i32) {
    %c0_i32 = arith.constant 0 : i32
    %c0_i32_0 = arith.constant 0 : i32
    return %c0_i32, %arg0 : i32, i32
  }
  func.func @transform_2(%arg0: i32, %arg1: i32) -> (i32, i32) {
    %c0_i32 = arith.constant 0 : i32
    return %arg1, %arg0 : i32, i32
  }
}

</mosaic_0001>

<llo_original>
// kernel: tpu_custom_call.1
$region0: #{tpu_custom_call.1}
  #allocation0 [shape = 'u32[]', space=smem, size = 0x4, offset = 0x4, fixed_abs, tag = 'smem constant byte address 0x4 - core index']
  #allocation1 [shape = 'u32[144,128]{1,0:T(1,128)}', space=vmem, size = 0x12000, scoped, tag = 'internal scratch']
  %s0 = inlined_call_operand.hbm [shape: f32[2,256], index: 0, kind: input, shape index: {}, may-alias: {0,2}]
  %s1 = inlined_call_operand.hbm [shape: f32[1,2048], index: 1, kind: input, shape index: {}]
  %s2 = inlined_call_operand.hbm [shape: f32[2,256], index: 2, kind: output, shape index: {}, may-alias: {0,2}]
  %s3 = sld [smem:[#allocation0]]
  $region49: #{tpu_custom_call.1} parent=0
    _
  %s5 = ssub.s32 1, %s3
  %s6 = scalar_select 0, %s5, %s3
  $region1: #{tpu_custom_call.1} parent=0
    #allocation2 [shape = 'u8[2048]{0}', space=vmem, size = 0x800, scoped, tag = 'input window, operand 0']
    #allocation3 [shape = 's32[2]{0}', space=sflag, size = 0x8, scoped, tag = 'scoped memory for tpu_custom_call.1']
    #allocation4 [shape = 's32[2]{0}', space=sflag, size = 0x8, scoped, tag = 'scoped memory for tpu_custom_call.1']
    #allocation5 [shape = 'u8[1024]{0}', space=vmem, size = 0x400, scoped, tag = 'input window, operand 1']
    #allocation6 [shape = 's32[2]{0}', space=sflag, size = 0x8, scoped, tag = 'scoped memory for tpu_custom_call.1']
    #allocation7 [shape = 'u8[2048]{0}', space=vmem, size = 0x800, scoped, tag = 'output window, operand 0']
    %7 = vsyncpa [#allocation3], 0
    %s8 = scalar_lea.sflag [#allocation3], 1
    %9 = vsyncpa %s8, 0
    %10 = vsyncpa [#allocation6], 0
    %s11 = scalar_lea.sflag [#allocation6], 1
    %12 = vsyncpa %s11, 0
    %13 = vsyncpa [#allocation4], 0
    %s14 = scalar_lea.sflag [#allocation4], 1
    %15 = vsyncpa %s14, 0
    loop: start=0, step=1, limit=4
    $region2: #{tpu_custom_call.1} parent=1 // loop_pre_header
      _
    $region3: #{tpu_custom_call.1} parent=1 // loop_header
      %s17 = sphi 0, %s21
      %p18 = scmp.ge.s32.totalorder %s17, 4
      %s24 = sphi 0, %s36
      %s25 = sphi 0, %s32
      %s26 = sphi 0, %s24
      %s27 = sphi 0, %s25
      %s28 = sphi 0, %s26
      %s29 = sphi 0, %s27
      %s41 = sphi 0, %s43
      %s44 = sphi 0, %s41
      %s45 = sphi 0, %s44
      %s61 = sphi 0, %s45
      %s67 = sphi 0, %s69
      %s70 = sphi 0, %s67
      %s71 = sphi 0, %s70
      %s87 = sphi 0, %s71
      %s95 = sphi 0, %s97
      %s98 = sphi 0, %s95
      %s99 = sphi 0, %s98
      %s115 = sphi 0, %s99
    $region4: #{tpu_custom_call.1} parent=1 // loop_header_branch
      %20 = sbr.rel (%p18) target = $region8
    $region5: #{tpu_custom_call.1} parent=1 // loop_body
      %s22 = ssub.s32 %s17, 1
      %s23 = ssub.s32 %s17, 2
      %s30 = sadd.s32 1, %s25
      %p31 = scmp.ge.s32.totalorder %s30, 1
      %s32 = scalar_select %p31, 0, %s30
      %s33 = sadd.s32 1, %s24
      %s34 = scalar_select %p31, %s33, %s24
      %p35 = scmp.ge.s32.totalorder %s34, 2
      %s36 = scalar_select %p35, 0, %s34
      %s37 = ssub.s32 %s25, %s32
      %s38 = ssub.s32 %s24, %s36
      %s39 = sor.u32 %s37, %s38
      %p40 = scmp.eq.s32.totalorder %s39, 0
      %s42 = sadd.s32 %s41, 1
      %s43 = scalar_select %p40, %s41, %s42
      %p46 = pneg %p40
      %p47 = scmp.eq.s32.totalorder %s17, 1
      %p48 = por %p46, %p47
      %p49 = scmp.ne.s32.totalorder %s41, %s44
      %p50 = scmp.eq.s32.totalorder %s17, 0
      %p51 = por %p49, %p50
      %p52 = scmp.ne.s32.totalorder %s41, %s44
      %p53 = scmp.eq.s32.totalorder %s22, 1
      %p54 = por %p52, %p53
      %p55 = scmp.ne.s32.totalorder %s44, %s45
      %p56 = scmp.eq.s32.totalorder %s22, 0
      %p57 = por %p55, %p56
      %p58 = scmp.ne.s32.totalorder %s44, %s45
      %p59 = scmp.eq.s32.totalorder %s23, 1
      %p60 = por %p58, %p59
      %p62 = scmp.ne.s32.totalorder %s45, %s61
      %p63 = scmp.eq.s32.totalorder %s23, 0
      %p64 = por %p62, %p63
      %s65 = ssub.s32 %s24, %s36
      %p66 = scmp.eq.s32.totalorder %s65, 0
      %s68 = sadd.s32 %s67, 1
      %s69 = scalar_select %p66, %s67, %s68
      %p72 = pneg %p66
      %p73 = scmp.eq.s32.totalorder %s17, 1
      %p74 = por %p72, %p73
      %p75 = scmp.ne.s32.totalorder %s67, %s70
      %p76 = scmp.eq.s32.totalorder %s17, 0
      %p77 = por %p75, %p76
      %p78 = scmp.ne.s32.totalorder %s67, %s70
      %p79 = scmp.eq.s32.totalorder %s22, 1
      %p80 = por %p78, %p79
      %p81 = scmp.ne.s32.totalorder %s70, %s71
      %p82 = scmp.eq.s32.totalorder %s22, 0
      %p83 = por %p81, %p82
      %p84 = scmp.ne.s32.totalorder %s70, %s71
      %p85 = scmp.eq.s32.totalorder %s23, 1
      %p86 = por %p84, %p85
      %p88 = scmp.ne.s32.totalorder %s71, %s87
      %p89 = scmp.eq.s32.totalorder %s23, 0
      %p90 = por %p88, %p89
      %s91 = ssub.s32 %s25, %s32
      %s92 = ssub.s32 %s24, %s36
      %s93 = sor.u32 %s91, %s92
      %p94 = scmp.eq.s32.totalorder %s93, 0
      %s96 = sadd.s32 %s95, 1
      %s97 = scalar_select %p94, %s95, %s96
      %p100 = pneg %p94
      %p101 = scmp.eq.s32.totalorder %s17, 1
      %p102 = por %p100, %p101
      %p103 = scmp.ne.s32.totalorder %s95, %s98
      %p104 = scmp.eq.s32.totalorder %s17, 0
      %p105 = por %p103, %p104
      %p106 = scmp.ne.s32.totalorder %s95, %s98
      %p107 = scmp.eq.s32.totalorder %s22, 1
      %p108 = por %p106, %p107
      %p109 = scmp.ne.s32.totalorder %s98, %s99
      %p110 = scmp.eq.s32.totalorder %s22, 0
      %p111 = por %p109, %p110
      %p112 = scmp.ne.s32.totalorder %s98, %s99
      %p113 = scmp.eq.s32.totalorder %s23, 1
      %p114 = por %p112, %p113
      %p116 = scmp.ne.s32.totalorder %s99, %s115
      %p117 = scmp.eq.s32.totalorder %s23, 0
      %p118 = por %p116, %p117
      %p119 = scmp.le.s32.totalorder 1, %s17
      %p120 = scmp.lt.s32.totalorder %s17, 3
      %p121 = pnand %p119, %p120
      %p122 = pneg %p121
      // Predicated region
      $region9: #{tpu_custom_call.1} parent=5 // pred_check
        _
      $region10: #{tpu_custom_call.1} parent=5 // pred_check_branch
        %124 = sbr.rel (%p121) target = $region12
      $region11: #{tpu_custom_call.1} parent=5 // pred_region
        %s125 = ssub.s32 %s17, 1
      $region12: #{tpu_custom_call.1} parent=5 // pred_fallthru
        _
      %p126 = scmp.lt.s32.totalorder %s17, 2
      // Predicated region
      $region13: #{tpu_custom_call.1} parent=5 // pred_check
        %p127 = pneg %p126
      $region14: #{tpu_custom_call.1} parent=5 // pred_check_branch
        %129 = sbr.rel (%p127) target = $region16
      $region15: #{tpu_custom_call.1} parent=5 // pred_region
        // Predicated region
        $region17: #{tpu_custom_call.1} parent=15 // pred_check
          %p130 = pneg %p51
        $region18: #{tpu_custom_call.1} parent=15 // pred_check_branch
          %132 = sbr.rel (%p130) target = $region20
        $region19: #{tpu_custom_call.1} parent=15 // pred_region
          %s133 = sand.u32 %s41, 1
          %s134 = scalar_lea.sflag [#allocation3], %s133
          %s135 = sand.u32 %s41, 1
          %s136 = smul.addr %s135, 2
          %s137 = scalar_lea.vmem [#allocation2], %s136
          %s139 = ssub.s32 32, 32
          %140 = vsyncadd %s134, %s139
          %s141 = smul.addr %s25, 2
          %s142 = sadd.s32 %s24, %s141
          %s143 = smul.addr %s142, 32
          %s144 = scalar_lea.hbm %s0, %s143
          %s146 = sshll.u32 %s137, 4
          %s147 = int_to_ptr.vmem [resolvable:$true] %s146
          %149 = dma.hbm_to_vmem [thread:$0]  %s144, 32, %s147, %s134
        $region20: #{tpu_custom_call.1} parent=15 // pred_fallthru
          _
        // Predicated region
        $region21: #{tpu_custom_call.1} parent=15 // pred_check
          %p150 = pneg %p77
        $region22: #{tpu_custom_call.1} parent=15 // pred_check_branch
          %152 = sbr.rel (%p150) target = $region24
        $region23: #{tpu_custom_call.1} parent=15 // pred_region
          %s153 = sand.u32 %s67, 1
          %s154 = scalar_lea.sflag [#allocation6], %s153
          %s155 = sand.u32 %s67, 1
          %s156 = scalar_lea.vmem [#allocation5], %s155
          %s158 = ssub.s32 16, 16
          %159 = vsyncadd %s154, %s158
          %s160 = smul.addr %s24, 16
          %s161 = scalar_lea.hbm %s1, %s160
          %s163 = sshll.u32 %s156, 4
          %s164 = int_to_ptr.vmem [resolvable:$true] %s163
          %166 = dma.hbm_to_vmem [thread:$0]  %s161, 16, %s164, %s154
        $region24: #{tpu_custom_call.1} parent=15 // pred_fallthru
          _
      $region16: #{tpu_custom_call.1} parent=5 // pred_fallthru
        _
      %p167 = scmp.le.s32.totalorder 1, %s17
      %p168 = scmp.lt.s32.totalorder %s17, 3
      %p169 = pnand %p167, %p168
      %p170 = pneg %p169
      // Predicated region
      $region25: #{tpu_custom_call.1} parent=5 // pred_check
        _
      $region26: #{tpu_custom_call.1} parent=5 // pred_check_branch
        %172 = sbr.rel (%p169) target = $region28
      $region27: #{tpu_custom_call.1} parent=5 // pred_region
        %s173 = ssub.s32 %s17, 1
        %s174 = sand.u32 %s44, 1
        %s175 = scalar_lea.sflag [#allocation3], %s174
        %s176 = sand.u32 %s44, 1
        %s177 = smul.addr %s176, 2
        %s178 = scalar_lea.vmem [#allocation2], %s177
        // Predicated region
        $region29: #{tpu_custom_call.1} parent=27 // pred_check
          %p179 = pneg %p57
        $region30: #{tpu_custom_call.1} parent=27 // pred_check_branch
          %181 = sbr.rel (%p179) target = $region32
        $region31: #{tpu_custom_call.1} parent=27 // pred_region
          %182 = dma.done %s175, 32
        $region32: #{tpu_custom_call.1} parent=27 // pred_fallthru
          _
        %s183 = sand.u32 %s70, 1
        %s184 = scalar_lea.sflag [#allocation6], %s183
        %s185 = sand.u32 %s70, 1
        %s186 = scalar_lea.vmem [#allocation5], %s185
        // Predicated region
        $region33: #{tpu_custom_call.1} parent=27 // pred_check
          %p187 = pneg %p83
        $region34: #{tpu_custom_call.1} parent=27 // pred_check_branch
          %189 = sbr.rel (%p187) target = $region36
        $region35: #{tpu_custom_call.1} parent=27 // pred_region
          %190 = dma.done %s184, 16
        $region36: #{tpu_custom_call.1} parent=27 // pred_fallthru
          _
        %s191 = sand.u32 %s44, 1
        %s192 = scalar_lea.sflag [#allocation3], %s191
        %s193 = sand.u32 %s44, 1
        %s194 = smul.addr %s193, 2
        %s195 = scalar_lea.vmem [#allocation2], %s194
        %p196 = pneg %p57
        %p197 = pneg %p54
        %s198 = sand.u32 %s70, 1
        %s199 = scalar_lea.sflag [#allocation6], %s198
        %s200 = sand.u32 %s70, 1
        %s201 = scalar_lea.vmem [#allocation5], %s200
        %p202 = pneg %p83
        %p203 = pneg %p80
        %p204 = pneg %p111
        %p205 = pneg %p108
        %s206 = sand.u32 %s98, 1
        %s207 = scalar_lea.sflag [#allocation4], %s206
        %s208 = sand.u32 %s98, 1
        %s209 = smul.addr %s208, 2
        %s210 = scalar_lea.vmem [#allocation7], %s209
        %v211 = vld [vmem:[%s178] sm:$0x3]
        %v212 = vld [vmem:[%s186] sm:$0x1]
        %v214 = vlaneseq
        %v215 = vshrl.u32 %v214, 7
        %v216 = vsub.s32 0, %v215
        %v217 = vrot.slane %v212, %v216
        %v219 = vadd.f32 %v211, %v217
        %220 = vst [vmem:[%s210] sm:$0x3] %v219
        %s221 = sand.u32 %s98, 1
        %s222 = scalar_lea.sflag [#allocation4], %s221
        %s223 = sand.u32 %s98, 1
        %s224 = smul.addr %s223, 2
        %s225 = scalar_lea.vmem [#allocation7], %s224
        // Predicated region
        $region37: #{tpu_custom_call.1} parent=27 // pred_check
          %p226 = pneg %p108
        $region38: #{tpu_custom_call.1} parent=27 // pred_check_branch
          %228 = sbr.rel (%p226) target = $region40
        $region39: #{tpu_custom_call.1} parent=27 // pred_region
          %s230 = ssub.s32 32, 32
          %231 = vsyncadd %s222, %s230
          %s232 = smul.addr %s27, 2
          %s233 = sadd.s32 %s26, %s232
          %s234 = smul.addr %s233, 32
          %s235 = scalar_lea.hbm %s2, %s234
          %s237 = sshll.u32 %s225, 4
          %s238 = int_to_ptr.vmem [resolvable:$true] %s237
          %240 = dma.vmem_to_hbm [thread:$0]  %s238, 32, %s235, %s222
        $region40: #{tpu_custom_call.1} parent=27 // pred_fallthru
          _
      $region28: #{tpu_custom_call.1} parent=5 // pred_fallthru
        _
      %p241 = scmp.le.s32.totalorder 2, %s17
      // Predicated region
      $region41: #{tpu_custom_call.1} parent=5 // pred_check
        %p242 = pneg %p241
      $region42: #{tpu_custom_call.1} parent=5 // pred_check_branch
        %244 = sbr.rel (%p242) target = $region44
      $region43: #{tpu_custom_call.1} parent=5 // pred_region
        %s245 = ssub.s32 %s17, 2
        // Predicated region
        $region45: #{tpu_custom_call.1} parent=43 // pred_check
          %p246 = pneg %p114
        $region46: #{tpu_custom_call.1} parent=43 // pred_check_branch
          %248 = sbr.rel (%p246) target = $region48
        $region47: #{tpu_custom_call.1} parent=43 // pred_region
          %s249 = sand.u32 %s99, 1
          %s250 = scalar_lea.sflag [#allocation4], %s249
          %s251 = sand.u32 %s99, 1
          %s252 = smul.addr %s251, 2
          %s253 = scalar_lea.vmem [#allocation7], %s252
          %254 = dma.done %s250, 32
        $region48: #{tpu_custom_call.1} parent=43 // pred_fallthru
          _
      $region44: #{tpu_custom_call.1} parent=5 // pred_fallthru
        _
    $region6: #{tpu_custom_call.1} parent=1 // loop_footer
      %s21 = sadd.s32 1, %s17
    $region7: #{tpu_custom_call.1} parent=1 // loop_footer_branch
      %16 = sbr.rel target = $region3
    $region8: #{tpu_custom_call.1} parent=1 // loop_exit
      _
    %255 = vsyncpa [#allocation3], 1
    %s256 = scalar_lea.sflag [#allocation3], 1
    %257 = vsyncpa %s256, 1
    %258 = vsyncpa [#allocation6], 1
    %s259 = scalar_lea.sflag [#allocation6], 1
    %260 = vsyncpa %s259, 1
    %261 = vsyncpa [#allocation4], 1
    %s262 = scalar_lea.sflag [#allocation4], 1
    %263 = vsyncpa %s262, 1

</llo_original>
